<compile_context>
chip_gen: v6e
topology: v6e:2x2x1
jax: 0.10.0
libtpu: 0.0.40
codegen_flags: <defaults>
</compile_context>

<pallas_src>
import functools

import jax
import jax.numpy as jnp
import numpy as np
from jax import lax
from jax.experimental import pallas as pl
from jax.experimental.pallas import tpu as pltpu

LANES = 128
TILE_ROWS = 2048       # (2048, 128) f32 block = 1 MiB; fits default scoped VMEM on v5e/v6e/v7x
NUM_CORES = 2          # leading "parallel" grid axis (v7x: 2 TCs; no-op on v5e/v6e)
OUT_ROWS = 8           # per-core output block is (8, 128) to satisfy TPU tiling


def _focal_sum_kernel(x_ref, t_ref, out_ref, acc_ref, *, gamma, threshold,
                      n_valid, tile_rows, chunks_per_core):
    c = pl.program_id(0)
    i = pl.program_id(1)
    n_inner = pl.num_programs(1)

    @pl.when(i == 0)
    def _init():
        acc_ref[...] = jnp.zeros_like(acc_ref)

    x = x_ref[...].astype(jnp.float32)
    t = t_ref[...].astype(jnp.float32)

    p = jax.nn.sigmoid(x)
    p = jnp.where(t >= threshold, p, 1.0 - p)

    # PyTorch clamps only inside the log; the (1 - p)**gamma factor uses the
    # *unclamped* p.  Reproduce that exactly.
    logp = -jnp.log(jnp.clip(p, 0.0001, 1.0 - 0.0001))
    q = 1.0 - p
    g = float(gamma)
    if g == 0.0:
        w = jnp.ones_like(q)
    elif g.is_integer() and 0.0 < g <= 8.0:
        w = q
        for _ in range(int(g) - 1):   # integer gamma: VPU multiplies, no EUP pow
            w = w * q
    else:
        w = q ** g                    # general gamma: exp/log on the EUP
    loss = logp * w

    # Flat element offset of this (logical) tile.
    # TODO(synk): switch the mask math to 64-bit if inputs ever exceed ~2^31
    # elements (int32 flat index would overflow).
    tile_elems = tile_rows * LANES
    start = (c * chunks_per_core + i) * tile_elems
    tile_is_full = start + tile_elems <= n_valid

    @pl.when(tile_is_full)
    def _acc_fast():                  # steady state: no mask work at all
        acc_ref[...] += loss

    @pl.when(jnp.logical_not(tile_is_full))
    def _acc_masked():                # only tiles containing padding / overrun
        rows, cols = loss.shape
        row_idx = lax.broadcasted_iota(jnp.int32, (rows, cols), 0)
        col_idx = lax.broadcasted_iota(jnp.int32, (rows, cols), 1)
        flat_idx = start + row_idx * cols + col_idx
        # Mask applied to the *final* loss so garbage (NaN/Inf) from the
        # over-covered region never reaches the accumulator.
        acc_ref[...] += jnp.where(flat_idx < n_valid, loss, 0.0)

    @pl.when(i == n_inner - 1)
    def _finalize():
        total = jnp.sum(acc_ref[...])
        row = lax.broadcasted_iota(jnp.int32, out_ref.shape, 0)
        col = lax.broadcasted_iota(jnp.int32, out_ref.shape, 1)
        # Put the per-core partial sum at [0, 0], zeros elsewhere.
        out_ref[...] = jnp.where((row == 0) & (col == 0), total, 0.0)


def multilabel_focal_loss(logits, targets, *, n_classes, gamma=2.0,
                          threshold=0.5, reduction="mean"):
    """Pallas TPU implementation of MultilabelFocalLoss.forward."""
    l_flat = jnp.reshape(logits, (-1,))
    t_flat = jnp.reshape(targets, (-1,))
    n_valid = int(l_flat.shape[0])

    # Lane-pad only the ragged tail (if any) so the flat view is (rows, 128);
    # padded elements are zeroed by the in-kernel tail mask.
    n_pad = (-n_valid) % LANES
    if n_pad:
        l_flat = jnp.pad(l_flat, (0, n_pad))
        t_flat = jnp.pad(t_flat, (0, n_pad))
    rows = (n_valid + n_pad) // LANES

    l2d = l_flat.reshape(rows, LANES)
    t2d = t_flat.reshape(rows, LANES)

    # Row tile: big blocks for large inputs, full-dim block for small ones.
    tile_rows = TILE_ROWS if rows >= TILE_ROWS else rows
    total_chunks = (rows + tile_rows - 1) // tile_rows
    chunks_per_core = (total_chunks + NUM_CORES - 1) // NUM_CORES
    max_block = total_chunks - 1

    def in_map(c, i):
        # Clamp: a logically out-of-range tile re-reads the last in-bounds
        # block; its contribution is fully masked inside the kernel.
        return (jnp.minimum(c * chunks_per_core + i, max_block), 0)

    kernel = functools.partial(
        _focal_sum_kernel,
        gamma=float(gamma),
        threshold=float(threshold),
        n_valid=n_valid,
        tile_rows=tile_rows,
        chunks_per_core=chunks_per_core,
    )

    partial_sums = pl.pallas_call(
        kernel,
        out_shape=jax.ShapeDtypeStruct((NUM_CORES * OUT_ROWS, LANES),
                                       jnp.float32),
        grid_spec=pltpu.PrefetchScalarGridSpec(
            num_scalar_prefetch=0,
            grid=(NUM_CORES, chunks_per_core),
            in_specs=[
                pl.BlockSpec((tile_rows, LANES), in_map),
                pl.BlockSpec((tile_rows, LANES), in_map),
            ],
            out_specs=pl.BlockSpec((OUT_ROWS, LANES), lambda c, i: (c, 0)),
            scratch_shapes=[pltpu.VMEM((tile_rows, LANES), jnp.float32)],
        ),
        compiler_params=pltpu.CompilerParams(
            dimension_semantics=("parallel", "arbitrary")),
    )(l2d, t2d)

    loss_sum = jnp.sum(partial_sums)   # only the [8*c, 0] entries are nonzero

    if reduction == "sum":
        return n_classes * loss_sum
    # 'mean' and any other value fall back to mean (matches the PyTorch module)
    return n_classes * loss_sum / n_valid


def _reference(logits, targets, *, n_classes, gamma=2.0, threshold=0.5,
               reduction="mean"):
    l = jnp.reshape(logits, (-1,)).astype(jnp.float32)
    t = jnp.reshape(targets, (-1,)).astype(jnp.float32)
    p = jax.nn.sigmoid(l)
    p = jnp.where(t >= threshold, p, 1.0 - p)
    logp = -jnp.log(jnp.clip(p, 0.0001, 1.0 - 0.0001))
    loss = logp * (1.0 - p) ** gamma
    if reduction == "sum":
        return n_classes * jnp.sum(loss)
    return n_classes * jnp.mean(loss)


if __name__ == "__main__":
    key = jax.random.PRNGKey(0)
    k1, k2, k3, k4 = jax.random.split(key, 4)

    # Case 1: f32 inputs, element count a multiple of 128 (fast path only).
    batch, n_classes = 8, 32
    logits = jax.random.normal(k1, (batch, n_classes), dtype=jnp.float32)
    targets = (jax.random.uniform(k2, (batch, n_classes)) > 0.5).astype(
        jnp.float32)
    out = multilabel_focal_loss(logits, targets, n_classes=n_classes,
                                gamma=2.0, threshold=0.5, reduction="mean")
    out = jax.block_until_ready(out)
    ref = _reference(logits, targets, n_classes=n_classes, gamma=2.0,
                     threshold=0.5, reduction="mean")
    np.testing.assert_allclose(np.asarray(out), np.asarray(ref),
                               rtol=1e-5, atol=1e-5)

    # Case 2: bf16 inputs with a ragged element count (exercises the masked
    # tail path and the native-dtype load).
    b2, c2 = 5, 37
    logits2 = jax.random.normal(k3, (b2, c2), dtype=jnp.bfloat16)
    targets2 = (jax.random.uniform(k4, (b2, c2)) > 0.5).astype(jnp.bfloat16)
    out2 = multilabel_focal_loss(logits2, targets2, n_classes=c2,
                                 gamma=2.0, threshold=0.5, reduction="sum")
    out2 = jax.block_until_ready(out2)
    ref2 = _reference(logits2, targets2, n_classes=c2, gamma=2.0,
                      threshold=0.5, reduction="sum")
    np.testing.assert_allclose(np.asarray(out2), np.asarray(ref2),
                               rtol=1e-4, atol=1e-4)

    print("KERNEL_OK")
</pallas_src>

<mosaic_0001>
module attributes {stable_mosaic.version = 11 : i64} {
  func.func @_focal_sum_kernel(%arg0: i32, %arg1: i32, %arg2: memref<2x128xf32, #tpu.memory_space<vmem>>, %arg3: memref<2x128xf32, #tpu.memory_space<vmem>>, %arg4: memref<8x128xf32, #tpu.memory_space<vmem>>, %arg5: memref<2x128xf32, #tpu.memory_space<vmem>>) attributes {dimension_semantics = [#tpu.dimension_semantics<parallel>, #tpu.dimension_semantics<arbitrary>], iteration_bounds = array<i64: 2, 1>, scalar_prefetch = 0 : i64, scratch_operands = 1 : i64, tpu.core_type = #tpu.core_type<tc>, window_params = [{transform_indices = @transform_0, window_bounds = array<i64: 2, 128>}, {transform_indices = @transform_1, window_bounds = array<i64: 2, 128>}, {transform_indices = @transform_2, window_bounds = array<i64: 8, 128>}]} {
    %c0_i32 = arith.constant 0 : i32
    %0 = arith.cmpi eq, %arg1, %c0_i32 : i32
    %1 = arith.extui %0 : i1 to i32
    %c0_i32_0 = arith.constant 0 : i32
    %2 = arith.cmpi ne, %1, %c0_i32_0 : i32
    scf.if %2 {
      %cst_16 = arith.constant 0.000000e+00 : f32
      %39 = vector.broadcast %cst_16 : f32 to vector<2x128xf32>
      %c0_17 = arith.constant 0 : index
      %c0_18 = arith.constant 0 : index
      %40 = vector.load %arg5[%c0_17, %c0_18] : memref<2x128xf32, #tpu.memory_space<vmem>>, vector<2x128xf32>
      tpu.vector_store %arg5[%c0_17, %c0_18], %39 {strides = array<i32>} : memref<2x128xf32, #tpu.memory_space<vmem>>, vector<2x128xf32>,
    } else {
    }
    %c0 = arith.constant 0 : index
    %c0_1 = arith.constant 0 : index
    %3 = vector.load %arg2[%c0, %c0_1] : memref<2x128xf32, #tpu.memory_space<vmem>>, vector<2x128xf32>
    %c0_2 = arith.constant 0 : index
    %c0_3 = arith.constant 0 : index
    %4 = vector.load %arg3[%c0_2, %c0_3] : memref<2x128xf32, #tpu.memory_space<vmem>>, vector<2x128xf32>
    %5 = arith.negf %3 : vector<2x128xf32>
    %6 = math.exp %5 : vector<2x128xf32>
    %cst = arith.constant 1.000000e+00 : f32
    %7 = vector.broadcast %cst : f32 to vector<2x128xf32>
    %8 = arith.addf %7, %6 : vector<2x128xf32>
    %9 = arith.divf %7, %8 : vector<2x128xf32>
    %cst_4 = arith.constant 5.000000e-01 : f32
    %10 = vector.broadcast %cst_4 : f32 to vector<2x128xf32>
    %11 = arith.cmpf oge, %4, %10 : vector<2x128xf32>
    %cst_5 = arith.constant 1.000000e+00 : f32
    %12 = vector.broadcast %cst_5 : f32 to vector<2x128xf32>
    %13 = arith.subf %12, %9 : vector<2x128xf32>
    %14 = arith.select %11, %9, %13 : vector<2x128xi1>, vector<2x128xf32>
    %cst_6 = arith.constant 9.99999974E-5 : f32
    %cst_7 = arith.constant 0.999899983 : f32
    %15 = vector.broadcast %cst_6 : f32 to vector<2x128xf32>
    %16 = arith.maximumf %15, %14 : vector<2x128xf32>
    %17 = vector.broadcast %cst_7 : f32 to vector<2x128xf32>
    %18 = arith.minimumf %17, %16 : vector<2x128xf32>
    %19 = math.log %18 : vector<2x128xf32>
    %cst_8 = arith.constant 0.000000e+00 : f32
    %20 = vector.broadcast %cst_8 : f32 to vector<2x128xf32>
    %21 = arith.subf %20, %19 : vector<2x128xf32>
    %cst_9 = arith.constant 1.000000e+00 : f32
    %22 = vector.broadcast %cst_9 : f32 to vector<2x128xf32>
    %23 = arith.subf %22, %14 : vector<2x128xf32>
    %24 = arith.mulf %23, %23 : vector<2x128xf32>
    %25 = arith.mulf %21, %24 : vector<2x128xf32>
    %c1_i32 = arith.constant 1 : i32
    %26 = arith.muli %arg0, %c1_i32 : i32
    %27 = arith.addi %26, %arg1 : i32
    %c256_i32 = arith.constant 256 : i32
    %28 = arith.muli %27, %c256_i32 : i32
    %c256_i32_10 = arith.constant 256 : i32
    %29 = arith.addi %28, %c256_i32_10 : i32
    %c256_i32_11 = arith.constant 256 : i32
    %30 = arith.cmpi sle, %29, %c256_i32_11 : i32
    %31 = arith.extui %30 : i1 to i32
    %c0_i32_12 = arith.constant 0 : i32
    %32 = arith.cmpi ne, %31, %c0_i32_12 : i32
    scf.if %32 {
      %c0_16 = arith.constant 0 : index
      %c0_17 = arith.constant 0 : index
      %39 = vector.load %arg5[%c0_16, %c0_17] : memref<2x128xf32, #tpu.memory_space<vmem>>, vector<2x128xf32>
      %40 = arith.addf %39, %25 : vector<2x128xf32>
      %c0_18 = arith.constant 0 : index
      %c0_19 = arith.constant 0 : index
      %41 = vector.load %arg5[%c0_18, %c0_19] : memref<2x128xf32, #tpu.memory_space<vmem>>, vector<2x128xf32>
      tpu.vector_store %arg5[%c0_18, %c0_19], %40 {strides = array<i32>} : memref<2x128xf32, #tpu.memory_space<vmem>>, vector<2x128xf32>,
    } else {
    }
    %true = arith.constant true
    %33 = arith.xori %30, %true : i1
    %34 = arith.extui %33 : i1 to i32
    %c0_i32_13 = arith.constant 0 : i32
    %35 = arith.cmpi ne, %34, %c0_i32_13 : i32
    scf.if %35 {
      %39 = tpu.iota {dimensions = array<i32: 0>} : vector<2x128xi32>
      %40 = tpu.iota {dimensions = array<i32: 1>} : vector<2x128xi32>
      %c128_i32 = arith.constant 128 : i32
      %41 = vector.broadcast %c128_i32 : i32 to vector<2x128xi32>
      %42 = arith.muli %39, %41 : vector<2x128xi32>
      %43 = vector.broadcast %28 : i32 to vector<2x128xi32>
      %44 = arith.addi %43, %42 : vector<2x128xi32>
      %45 = arith.addi %44, %40 : vector<2x128xi32>
      %c0_16 = arith.constant 0 : index
      %c0_17 = arith.constant 0 : index
      %46 = vector.load %arg5[%c0_16, %c0_17] : memref<2x128xf32, #tpu.memory_space<vmem>>, vector<2x128xf32>
      %c256_i32_18 = arith.constant 256 : i32
      %47 = vector.broadcast %c256_i32_18 : i32 to vector<2x128xi32>
      %48 = arith.cmpi slt, %45, %47 : vector<2x128xi32>
      %cst_19 = arith.constant 0.000000e+00 : f32
      %49 = vector.broadcast %cst_19 : f32 to vector<2x128xf32>
      %50 = arith.select %48, %25, %49 : vector<2x128xi1>, vector<2x128xf32>
      %51 = arith.addf %46, %50 : vector<2x128xf32>
      %c0_20 = arith.constant 0 : index
      %c0_21 = arith.constant 0 : index
      %52 = vector.load %arg5[%c0_20, %c0_21] : memref<2x128xf32, #tpu.memory_space<vmem>>, vector<2x128xf32>
      tpu.vector_store %arg5[%c0_20, %c0_21], %51 {strides = array<i32>} : memref<2x128xf32, #tpu.memory_space<vmem>>, vector<2x128xf32>,
    } else {
    }
    %c0_i32_14 = arith.constant 0 : i32
    %36 = arith.cmpi eq, %arg1, %c0_i32_14 : i32
    %37 = arith.extui %36 : i1 to i32
    %c0_i32_15 = arith.constant 0 : i32
    %38 = arith.cmpi ne, %37, %c0_i32_15 : i32
    scf.if %38 {
      %c0_16 = arith.constant 0 : index
      %c0_17 = arith.constant 0 : index
      %39 = vector.load %arg5[%c0_16, %c0_17] : memref<2x128xf32, #tpu.memory_space<vmem>>, vector<2x128xf32>
      %40 = vector.shape_cast %39 : vector<2x128xf32> to vector<1x2x128xf32>
      %cst_18 = arith.constant dense<0.000000e+00> : vector<1xf32>
      %41 = vector.multi_reduction <add>, %40, %cst_18 [1, 2] : vector<1x2x128xf32> to vector<1xf32>
      %42 = vector.shape_cast %41 : vector<1xf32> to vector<1x1x1xf32>
      %43 = vector.extract %42[0, 0, 0] : f32 from vector<1x1x1xf32>
      %44 = tpu.iota {dimensions = array<i32: 0>} : vector<8x128xi32>
      %45 = tpu.iota {dimensions = array<i32: 1>} : vector<8x128xi32>
      %c0_i32_19 = arith.constant 0 : i32
      %46 = vector.broadcast %c0_i32_19 : i32 to vector<8x128xi32>
      %47 = arith.cmpi eq, %44, %46 : vector<8x128xi32>
      %c0_i32_20 = arith.constant 0 : i32
      %48 = vector.broadcast %c0_i32_20 : i32 to vector<8x128xi32>
      %49 = arith.cmpi eq, %45, %48 : vector<8x128xi32>
      %50 = arith.andi %47, %49 : vector<8x128xi1>
      %cst_21 = arith.constant 0.000000e+00 : f32
      %51 = vector.broadcast %43 : f32 to vector<8x128xf32>
      %52 = vector.broadcast %cst_21 : f32 to vector<8x128xf32>
      %53 = arith.select %50, %51, %52 : vector<8x128xi1>, vector<8x128xf32>
      %c0_22 = arith.constant 0 : index
      %c0_23 = arith.constant 0 : index
      %54 = vector.load %arg4[%c0_22, %c0_23] : memref<8x128xf32, #tpu.memory_space<vmem>>, vector<8x128xf32>
      tpu.vector_store %arg4[%c0_22, %c0_23], %53 {strides = array<i32>} : memref<8x128xf32, #tpu.memory_space<vmem>>, vector<8x128xf32>,
    } else {
    }
    return
  }
  func.func @transform_0(%arg0: i32, %arg1: i32) -> (i32, i32) {
    %c1_i32 = arith.constant 1 : i32
    %0 = arith.muli %arg0, %c1_i32 : i32
    %1 = arith.addi %0, %arg1 : i32
    %c0_i32 = arith.constant 0 : i32
    %2 = arith.minsi %1, %c0_i32 : i32
    %c0_i32_0 = arith.constant 0 : i32
    %c0_i32_1 = arith.constant 0 : i32
    return %2, %c0_i32_0 : i32, i32
  }
  func.func @transform_1(%arg0: i32, %arg1: i32) -> (i32, i32) {
    %c1_i32 = arith.constant 1 : i32
    %0 = arith.muli %arg0, %c1_i32 : i32
    %1 = arith.addi %0, %arg1 : i32
    %c0_i32 = arith.constant 0 : i32
    %2 = arith.minsi %1, %c0_i32 : i32
    %c0_i32_0 = arith.constant 0 : i32
    %c0_i32_1 = arith.constant 0 : i32
    return %2, %c0_i32_0 : i32, i32
  }
  func.func @transform_2(%arg0: i32, %arg1: i32) -> (i32, i32) {
    %c0_i32 = arith.constant 0 : i32
    %c0_i32_0 = arith.constant 0 : i32
    return %arg0, %c0_i32 : i32, i32
  }
}

</mosaic_0001>

<llo_original>
// kernel: tpu_custom_call.1
$region0: #{tpu_custom_call.1}
  #allocation0 [shape = 'u32[]', space=smem, size = 0x4, offset = 0x4, fixed_abs, tag = 'smem constant byte address 0x4 - core index']
  #allocation1 [shape = 'u32[144,128]{1,0:T(1,128)}', space=vmem, size = 0x12000, scoped, tag = 'internal scratch']
  #allocation2 [shape = 'f32[2,128]{1,0:T(2,128)}', space=vmem, size = 0x400, scoped, tag = 'scratch operand']
  %s0 = inlined_call_operand.hbm [shape: f32[2,128], index: 0, kind: input, shape index: {}]
  %s1 = inlined_call_operand.hbm [shape: f32[2,128], index: 1, kind: input, shape index: {}]
  %s2 = inlined_call_operand.hbm [shape: f32[16,128], index: 2, kind: output, shape index: {}]
  %s3 = sld [smem:[#allocation0]]
  $region65: #{tpu_custom_call.1} parent=0
    _
  %s5 = ssub.s32 1, %s3
  %s6 = scalar_select 0, %s5, %s3
  $region1: #{tpu_custom_call.1} parent=0
    #allocation3 [shape = 'u8[2048]{0}', space=vmem, size = 0x800, scoped, tag = 'input window, operand 0']
    #allocation4 [shape = 's32[2]{0}', space=sflag, size = 0x8, scoped, tag = 'scoped memory for tpu_custom_call.1']
    #allocation5 [shape = 's32[2]{0}', space=sflag, size = 0x8, scoped, tag = 'scoped memory for tpu_custom_call.1']
    #allocation6 [shape = 'u8[2048]{0}', space=vmem, size = 0x800, scoped, tag = 'input window, operand 1']
    #allocation7 [shape = 's32[2]{0}', space=sflag, size = 0x8, scoped, tag = 'scoped memory for tpu_custom_call.1']
    #allocation8 [shape = 'u8[8192]{0}', space=vmem, size = 0x2000, scoped, tag = 'output window, operand 0']
    %7 = vsyncpa [#allocation4], 0
    %s8 = scalar_lea.sflag [#allocation4], 1
    %9 = vsyncpa %s8, 0
    %10 = vsyncpa [#allocation7], 0
    %s11 = scalar_lea.sflag [#allocation7], 1
    %12 = vsyncpa %s11, 0
    %13 = vsyncpa [#allocation5], 0
    %s14 = scalar_lea.sflag [#allocation5], 1
    %15 = vsyncpa %s14, 0
    loop: start=0, step=1, limit=4
    $region2: #{tpu_custom_call.1} parent=1 // loop_pre_header
      _
    $region3: #{tpu_custom_call.1} parent=1 // loop_header
      %s17 = sphi 0, %s21
      %p18 = scmp.ge.s32.totalorder %s17, 4
      %s24 = sphi 0, %s36
      %s25 = sphi 0, %s32
      %s26 = sphi 0, %s24
      %s27 = sphi 0, %s25
      %s28 = sphi 0, %s26
      %s29 = sphi 0, %s27
      %s45 = sphi 0, %s47
      %s48 = sphi 0, %s45
      %s49 = sphi 0, %s48
      %s65 = sphi 0, %s49
      %s77 = sphi 0, %s79
      %s80 = sphi 0, %s77
      %s81 = sphi 0, %s80
      %s97 = sphi 0, %s81
      %s103 = sphi 0, %s105
      %s106 = sphi 0, %s103
      %s107 = sphi 0, %s106
      %s123 = sphi 0, %s107
    $region4: #{tpu_custom_call.1} parent=1 // loop_header_branch
      %20 = sbr.rel (%p18) target = $region8
    $region5: #{tpu_custom_call.1} parent=1 // loop_body
      %s22 = ssub.s32 %s17, 1
      %s23 = ssub.s32 %s17, 2
      %s30 = sadd.s32 1, %s25
      %p31 = scmp.ge.s32.totalorder %s30, 1
      %s32 = scalar_select %p31, 0, %s30
      %s33 = sadd.s32 1, %s24
      %s34 = scalar_select %p31, %s33, %s24
      %p35 = scmp.ge.s32.totalorder %s34, 2
      %s36 = scalar_select %p35, 0, %s34
      %s37 = sadd.s32 %s24, %s25
      %p38 = scmp.lt.s32.totalorder %s37, 0
      %s39 = scalar_select %p38, %s37, 0
      %s40 = sadd.s32 %s36, %s32
      %p41 = scmp.lt.s32.totalorder %s40, 0
      %s42 = scalar_select %p41, %s40, 0
      %s43 = ssub.s32 %s39, %s42
      %p44 = scmp.eq.s32.totalorder %s43, 0
      %s46 = sadd.s32 %s45, 1
      %s47 = scalar_select %p44, %s45, %s46
      %p50 = pneg %p44
      %p51 = scmp.eq.s32.totalorder %s17, 1
      %p52 = por %p50, %p51
      %p53 = scmp.ne.s32.totalorder %s45, %s48
      %p54 = scmp.eq.s32.totalorder %s17, 0
      %p55 = por %p53, %p54
      %p56 = scmp.ne.s32.totalorder %s45, %s48
      %p57 = scmp.eq.s32.totalorder %s22, 1
      %p58 = por %p56, %p57
      %p59 = scmp.ne.s32.totalorder %s48, %s49
      %p60 = scmp.eq.s32.totalorder %s22, 0
      %p61 = por %p59, %p60
      %p62 = scmp.ne.s32.totalorder %s48, %s49
      %p63 = scmp.eq.s32.totalorder %s23, 1
      %p64 = por %p62, %p63
      %p66 = scmp.ne.s32.totalorder %s49, %s65
      %p67 = scmp.eq.s32.totalorder %s23, 0
      %p68 = por %p66, %p67
      %s69 = sadd.s32 %s24, %s25
      %p70 = scmp.lt.s32.totalorder %s69, 0
      %s71 = scalar_select %p70, %s69, 0
      %s72 = sadd.s32 %s36, %s32
      %p73 = scmp.lt.s32.totalorder %s72, 0
      %s74 = scalar_select %p73, %s72, 0
      %s75 = ssub.s32 %s71, %s74
      %p76 = scmp.eq.s32.totalorder %s75, 0
      %s78 = sadd.s32 %s77, 1
      %s79 = scalar_select %p76, %s77, %s78
      %p82 = pneg %p76
      %p83 = scmp.eq.s32.totalorder %s17, 1
      %p84 = por %p82, %p83
      %p85 = scmp.ne.s32.totalorder %s77, %s80
      %p86 = scmp.eq.s32.totalorder %s17, 0
      %p87 = por %p85, %p86
      %p88 = scmp.ne.s32.totalorder %s77, %s80
      %p89 = scmp.eq.s32.totalorder %s22, 1
      %p90 = por %p88, %p89
      %p91 = scmp.ne.s32.totalorder %s80, %s81
      %p92 = scmp.eq.s32.totalorder %s22, 0
      %p93 = por %p91, %p92
      %p94 = scmp.ne.s32.totalorder %s80, %s81
      %p95 = scmp.eq.s32.totalorder %s23, 1
      %p96 = por %p94, %p95
      %p98 = scmp.ne.s32.totalorder %s81, %s97
      %p99 = scmp.eq.s32.totalorder %s23, 0
      %p100 = por %p98, %p99
      %s101 = ssub.s32 %s24, %s36
      %p102 = scmp.eq.s32.totalorder %s101, 0
      %s104 = sadd.s32 %s103, 1
      %s105 = scalar_select %p102, %s103, %s104
      %p108 = pneg %p102
      %p109 = scmp.eq.s32.totalorder %s17, 1
      %p110 = por %p108, %p109
      %p111 = scmp.ne.s32.totalorder %s103, %s106
      %p112 = scmp.eq.s32.totalorder %s17, 0
      %p113 = por %p111, %p112
      %p114 = scmp.ne.s32.totalorder %s103, %s106
      %p115 = scmp.eq.s32.totalorder %s22, 1
      %p116 = por %p114, %p115
      %p117 = scmp.ne.s32.totalorder %s106, %s107
      %p118 = scmp.eq.s32.totalorder %s22, 0
      %p119 = por %p117, %p118
      %p120 = scmp.ne.s32.totalorder %s106, %s107
      %p121 = scmp.eq.s32.totalorder %s23, 1
      %p122 = por %p120, %p121
      %p124 = scmp.ne.s32.totalorder %s107, %s123
      %p125 = scmp.eq.s32.totalorder %s23, 0
      %p126 = por %p124, %p125
      %p127 = scmp.le.s32.totalorder 1, %s17
      %p128 = scmp.lt.s32.totalorder %s17, 3
      %p129 = pnand %p127, %p128
      %p130 = pneg %p129
      // Predicated region
      $region9: #{tpu_custom_call.1} parent=5 // pred_check
        _
      $region10: #{tpu_custom_call.1} parent=5 // pred_check_branch
        %132 = sbr.rel (%p129) target = $region12
      $region11: #{tpu_custom_call.1} parent=5 // pred_region
        %s133 = ssub.s32 %s17, 1
      $region12: #{tpu_custom_call.1} parent=5 // pred_fallthru
        _
      %p134 = scmp.lt.s32.totalorder %s17, 2
      // Predicated region
      $region13: #{tpu_custom_call.1} parent=5 // pred_check
        %p135 = pneg %p134
      $region14: #{tpu_custom_call.1} parent=5 // pred_check_branch
        %137 = sbr.rel (%p135) target = $region16
      $region15: #{tpu_custom_call.1} parent=5 // pred_region
        // Predicated region
        $region17: #{tpu_custom_call.1} parent=15 // pred_check
          %p138 = pneg %p55
        $region18: #{tpu_custom_call.1} parent=15 // pred_check_branch
          %140 = sbr.rel (%p138) target = $region20
        $region19: #{tpu_custom_call.1} parent=15 // pred_region
          %s141 = sand.u32 %s45, 1
          %s142 = scalar_lea.sflag [#allocation4], %s141
          %s143 = sand.u32 %s45, 1
          %s144 = smul.addr %s143, 2
          %s145 = scalar_lea.vmem [#allocation3], %s144
          %s146 = sadd.s32 %s24, %s25
          %p147 = scmp.lt.s32.totalorder %s146, 0
          %s148 = scalar_select %p147, %s146, 0
          %s150 = ssub.s32 32, 32
          %151 = vsyncadd %s142, %s150
          %s152 = smul.addr %s148, 32
          %s153 = scalar_lea.hbm %s0, %s152
          %s155 = sshll.u32 %s145, 4
          %s156 = int_to_ptr.vmem [resolvable:$true] %s155
          %158 = dma.hbm_to_vmem [thread:$0]  %s153, 32, %s156, %s142
        $region20: #{tpu_custom_call.1} parent=15 // pred_fallthru
          _
        // Predicated region
        $region21: #{tpu_custom_call.1} parent=15 // pred_check
          %p159 = pneg %p87
        $region22: #{tpu_custom_call.1} parent=15 // pred_check_branch
          %161 = sbr.rel (%p159) target = $region24
        $region23: #{tpu_custom_call.1} parent=15 // pred_region
          %s162 = sand.u32 %s77, 1
          %s163 = scalar_lea.sflag [#allocation7], %s162
          %s164 = sand.u32 %s77, 1
          %s165 = smul.addr %s164, 2
          %s166 = scalar_lea.vmem [#allocation6], %s165
          %s167 = sadd.s32 %s24, %s25
          %p168 = scmp.lt.s32.totalorder %s167, 0
          %s169 = scalar_select %p168, %s167, 0
          %s171 = ssub.s32 32, 32
          %172 = vsyncadd %s163, %s171
          %s173 = smul.addr %s169, 32
          %s174 = scalar_lea.hbm %s1, %s173
          %s176 = sshll.u32 %s166, 4
          %s177 = int_to_ptr.vmem [resolvable:$true] %s176
          %179 = dma.hbm_to_vmem [thread:$0]  %s174, 32, %s177, %s163
        $region24: #{tpu_custom_call.1} parent=15 // pred_fallthru
          _
      $region16: #{tpu_custom_call.1} parent=5 // pred_fallthru
        _
      %p180 = scmp.le.s32.totalorder 1, %s17
      %p181 = scmp.lt.s32.totalorder %s17, 3
      %p182 = pnand %p180, %p181
      %p183 = pneg %p182
      // Predicated region
      $region25: #{tpu_custom_call.1} parent=5 // pred_check
        _
      $region26: #{tpu_custom_call.1} parent=5 // pred_check_branch
        %185 = sbr.rel (%p182) target = $region28
      $region27: #{tpu_custom_call.1} parent=5 // pred_region
        %s186 = ssub.s32 %s17, 1
        %s187 = sand.u32 %s48, 1
        %s188 = scalar_lea.sflag [#allocation4], %s187
        %s189 = sand.u32 %s48, 1
        %s190 = smul.addr %s189, 2
        %s191 = scalar_lea.vmem [#allocation3], %s190
        // Predicated region
        $region29: #{tpu_custom_call.1} parent=27 // pred_check
          %p192 = pneg %p61
        $region30: #{tpu_custom_call.1} parent=27 // pred_check_branch
          %194 = sbr.rel (%p192) target = $region32
        $region31: #{tpu_custom_call.1} parent=27 // pred_region
          %195 = dma.done %s188, 32
        $region32: #{tpu_custom_call.1} parent=27 // pred_fallthru
          _
        %s196 = sand.u32 %s80, 1
        %s197 = scalar_lea.sflag [#allocation7], %s196
        %s198 = sand.u32 %s80, 1
        %s199 = smul.addr %s198, 2
        %s200 = scalar_lea.vmem [#allocation6], %s199
        // Predicated region
        $region33: #{tpu_custom_call.1} parent=27 // pred_check
          %p201 = pneg %p93
        $region34: #{tpu_custom_call.1} parent=27 // pred_check_branch
          %203 = sbr.rel (%p201) target = $region36
        $region35: #{tpu_custom_call.1} parent=27 // pred_region
          %204 = dma.done %s197, 32
        $region36: #{tpu_custom_call.1} parent=27 // pred_fallthru
          _
        %s205 = sand.u32 %s48, 1
        %s206 = scalar_lea.sflag [#allocation4], %s205
        %s207 = sand.u32 %s48, 1
        %s208 = smul.addr %s207, 2
        %s209 = scalar_lea.vmem [#allocation3], %s208
        %p210 = pneg %p61
        %p211 = pneg %p58
        %s212 = sand.u32 %s80, 1
        %s213 = scalar_lea.sflag [#allocation7], %s212
        %s214 = sand.u32 %s80, 1
        %s215 = smul.addr %s214, 2
        %s216 = scalar_lea.vmem [#allocation6], %s215
        %p217 = pneg %p93
        %p218 = pneg %p90
        %p219 = pneg %p119
        %p220 = pneg %p116
        %s221 = sand.u32 %s106, 1
        %s222 = scalar_lea.sflag [#allocation5], %s221
        %s223 = sand.u32 %s106, 1
        %s224 = smul.addr %s223, 8
        %s225 = scalar_lea.vmem [#allocation8], %s224
        %s226 = sadd.s32 %s26, %s27
        %p227 = scmp.lt.s32.totalorder %s226, 0
        %s228 = scalar_select %p227, %s226, 0
        %s229 = sadd.s32 %s26, %s27
        %p230 = scmp.lt.s32.totalorder %s229, 0
        %s231 = scalar_select %p230, %s229, 0
        %p232 = scmp.eq.s32.totalorder %s27, 0
        // Predicated region
        $region37: #{tpu_custom_call.1} parent=27 // pred_check
          %p233 = pneg %p232
        $region38: #{tpu_custom_call.1} parent=27 // pred_check_branch
          %235 = sbr.rel (%p233) target = $region40
        $region39: #{tpu_custom_call.1} parent=27 // pred_region
          %236 = vst [vmem:[#allocation2] sm:$0x3] 0.0
        $region40: #{tpu_custom_call.1} parent=27 // pred_fallthru
          _
        %v237 = vld [vmem:[%s191] sm:$0x3]
        %v238 = vld [vmem:[%s200] sm:$0x3]
        %v239 = vxor.u32 %v237, 2147483648
        %v240 = vmul.f32 %v239, 1.442695
        %v241 = vpow.pop %v240
        %v242 = vadd.f32 %v241, 1.0
        %v243 = vrcp.pop %v242
        %v244 = vmul.f32 1.0, %v243
        %vm245 = vcmp.ge.f32.partialorder %v238, 0.5
        %v246 = vsub.f32 1.0, %v244
        %v247 = vsel %vm245, %v244, %v246
        %v248 = vmax.f32 %v247, 0.0001
        %v249 = vmin.f32 %v248, 0.9999
        %v250 = vlog2.pop %v249
        %v251 = vmul.f32 %v250, 0.6931472
        %v252 = vsub.f32 0.0, %v251
        %v253 = vsub.f32 1.0, %v247
        %v254 = vmul.f32 %v253, %v253
        %v255 = vmul.f32 %v252, %v254
        %s256 = sadd.s32 %s26, %s27
        %s257 = smul.u32 %s256, 256
        %s258 = sadd.s32 %s257, 256
        %p259 = scmp.le.s32.totalorder %s258, 256
        // Predicated region
        $region41: #{tpu_custom_call.1} parent=27 // pred_check
          %p260 = pneg %p259
        $region42: #{tpu_custom_call.1} parent=27 // pred_check_branch
          %262 = sbr.rel (%p260) target = $region44
        $region43: #{tpu_custom_call.1} parent=27 // pred_region
          %v263 = vld [vmem:[#allocation2] sm:$0x3]
          %v264 = vadd.f32 %v263, %v255
          %265 = vst [vmem:[#allocation2] sm:$0x3] %v264
        $region44: #{tpu_custom_call.1} parent=27 // pred_fallthru
          _
        %p266 = scmp.gt.s32.totalorder %s258, 256
        // Predicated region
        $region45: #{tpu_custom_call.1} parent=27 // pred_check
          %p267 = pneg %p266
        $region46: #{tpu_custom_call.1} parent=27 // pred_check_branch
          %269 = sbr.rel (%p267) target = $region48
        $region47: #{tpu_custom_call.1} parent=27 // pred_region
          %v270 = vlaneseq
          %v271 = vshrl.u32 %v270, 7
          %v272 = vlaneseq
          %v273 = vand.u32 %v272, 127
          %v274 = vmul.u32 %v271, 128
          %v275 = vstv %s257
          %v276 = vadd.s32 %v275, %v274
          %v277 = vadd.s32 %v276, %v273
          %v278 = vld [vmem:[#allocation2] sm:$0x3]
          %vm279 = vcmp.lt.s32.totalorder %v277, 256
          %v280 = vsel %vm279, %v255, 0.0
          %v281 = vadd.f32 %v278, %v280
          %282 = vst [vmem:[#allocation2] sm:$0x3] %v281
        $region48: #{tpu_custom_call.1} parent=27 // pred_fallthru
          _
        // Predicated region
        $region49: #{tpu_custom_call.1} parent=27 // pred_check
          %p283 = pneg %p232
        $region50: #{tpu_custom_call.1} parent=27 // pred_check_branch
          %285 = sbr.rel (%p283) target = $region52
        $region51: #{tpu_custom_call.1} parent=27 // pred_region
          %v286 = vld [vmem:[#allocation2] sm:$0x3]
          %vm287 = vcmask 1041408
          %v288 = vsel %vm287, %v286, 0.0
          %289 = vadd.xlane.f32.xlu0 %v288
          %v290 = vpop.xlane.xlu0 %289
          %v291 = vrot.slane %v290, 4
          %v292 = vadd.f32 %v290, %v291
          %v293 = vrot.slane %v292, 2
          %v294 = vadd.f32 %v292, %v293
          %v295 = vrot.slane %v294, 1
          %v296 = vadd.f32 %v294, %v295
          %s297 = vtos %v296
          %v298 = vlaneseq
          %v299 = vshrl.u32 %v298, 7
          %v300 = vlaneseq
          %v301 = vand.u32 %v300, 127
          %vm302 = vcmp.eq.s32.totalorder %v299, 0
          %vm303 = vcmp.eq.s32.totalorder %v301, 0
          %vm304 = vmand %vm302, %vm303
          %v305 = vstv %s297
          %v306 = vsel %vm304, %v305, 0.0
          %307 = vst [vmem:[%s225] sm:$0xff] %v306
        $region52: #{tpu_custom_call.1} parent=27 // pred_fallthru
          _
        %s308 = sand.u32 %s106, 1
        %s309 = scalar_lea.sflag [#allocation5], %s308
        %s310 = sand.u32 %s106, 1
        %s311 = smul.addr %s310, 8
        %s312 = scalar_lea.vmem [#allocation8], %s311
        // Predicated region
        $region53: #{tpu_custom_call.1} parent=27 // pred_check
          %p313 = pneg %p116
        $region54: #{tpu_custom_call.1} parent=27 // pred_check_branch
          %315 = sbr.rel (%p313) target = $region56
        $region55: #{tpu_custom_call.1} parent=27 // pred_region
          %s317 = ssub.s32 128, 128
          %318 = vsyncadd %s309, %s317
          %s319 = smul.addr %s26, 128
          %s320 = scalar_lea.hbm %s2, %s319
          %s322 = sshll.u32 %s312, 4
          %s323 = int_to_ptr.vmem [resolvable:$true] %s322
          %325 = dma.vmem_to_hbm [thread:$0]  %s323, 128, %s320, %s309
        $region56: #{tpu_custom_call.1} parent=27 // pred_fallthru
          _
      $region28: #{tpu_custom_call.1} parent=5 // pred_fallthru
        _
      %p326 = scmp.le.s32.totalorder 2, %s17
      // Predicated region
      $region57: #{tpu_custom_call.1} parent=5 // pred_check
        %p327 = pneg %p326
      $region58: #{tpu_custom_call.1} parent=5 // pred_check_branch
        %329 = sbr.rel (%p327) target = $region60
      $region59: #{tpu_custom_call.1} parent=5 // pred_region
        %s330 = ssub.s32 %s17, 2
        // Predicated region
        $region61: #{tpu_custom_call.1} parent=59 // pred_check
          %p331 = pneg %p122
        $region62: #{tpu_custom_call.1} parent=59 // pred_check_branch
          %333 = sbr.rel (%p331) target = $region64
        $region63: #{tpu_custom_call.1} parent=59 // pred_region
          %s334 = sand.u32 %s107, 1
          %s335 = scalar_lea.sflag [#allocation5], %s334
          %s336 = sand.u32 %s107, 1
          %s337 = smul.addr %s336, 8
          %s338 = scalar_lea.vmem [#allocation8], %s337
          %339 = dma.done %s335, 128
        $region64: #{tpu_custom_call.1} parent=59 // pred_fallthru
          _
      $region60: #{tpu_custom_call.1} parent=5 // pred_fallthru
        _
    $region6: #{tpu_custom_call.1} parent=1 // loop_footer
      %s21 = sadd.s32 1, %s17
    $region7: #{tpu_custom_call.1} parent=1 // loop_footer_branch
      %16 = sbr.rel target = $region3
    $region8: #{tpu_custom_call.1} parent=1 // loop_exit
      _
    %340 = vsyncpa [#allocation4], 1
    %s341 = scalar_lea.sflag [#allocation4], 1
    %342 = vsyncpa %s341, 1
    %343 = vsyncpa [#allocation7], 1
    %s344 = scalar_lea.sflag [#allocation7], 1
    %345 = vsyncpa %s344, 1
    %346 = vsyncpa [#allocation5], 1
    %s347 = scalar_lea.sflag [#allocation5], 1
    %348 = vsyncpa %s347, 1

</llo_original>
